<compile_context>
chip_gen: v6e
topology: v6e:2x2x1
jax: 0.10.0
libtpu: 0.0.40
codegen_flags: <defaults>
</compile_context>

<pallas_src>
import math

import jax
import jax.numpy as jnp
from jax import lax
from jax.experimental import pallas as pl
from jax.experimental.pallas import tpu as pltpu


# ---------------------------------------------------------------------------
# Hardware queries (with safe fallbacks if the query API is unavailable).
# ---------------------------------------------------------------------------
def _vmem_capacity_bytes():
    try:
        cap = getattr(pltpu.get_tpu_info(), "vmem_capacity_bytes", None)
        if cap and int(cap) > 0:
            return int(cap)
    except Exception:
        pass
    return 64 * 1024 * 1024            # conservative default (v7x per-TC VMEM)


def _num_tensorcores():
    try:
        info = pltpu.get_tpu_info()
        for name in ("num_cores", "core_count", "num_tensorcores"):
            v = getattr(info, name, None)
            if isinstance(v, int) and v > 0:
                return v
    except Exception:
        pass
    return 1                           # v5e / v6e: a single TensorCore per chip


def _round_up(x, m):
    return ((x + m - 1) // m) * m


def _pick_divisor_tile(n, cap, base):
    """Largest d | n with d % base == 0 and d <= cap; falls back to the full dim."""
    cap = max(base, min(cap, n))
    cap -= cap % base
    for d in range(cap, 0, -base):
        if n % d == 0:
            return d
    return n                           # full extent is always a legal block size


# ---------------------------------------------------------------------------
# Input-projection kernel: (tm, F)bf16 @ (F, 3Hp)bf16 -> f32 accum + bias -> bf16.
# BN scale/shift is already folded into w_ref / b_ref.
# ---------------------------------------------------------------------------
def proj_kernel(x_ref, w_ref, b_ref, o_ref):
    acc = jnp.dot(x_ref[...], w_ref[...], preferred_element_type=jnp.float32)
    o_ref[...] = (acc + b_ref[...]).astype(o_ref.dtype)


# ---------------------------------------------------------------------------
# GRU recurrence kernel (time-major blocks).
#   grid = (n_bshards, T // Tb); batch axis "parallel", time axis "arbitrary".
#   xw_ref  : (Tb, Bb, 3Hp) bf16  precomputed input projections for this chunk
#   whh_ref : (Hp, 3Hp)     bf16  hidden->hidden weights, gates fused [r | z | n]
#   o_ref   : (Tb, Bb, Hp)  f32   hidden states for this chunk
#   h_ref   : VMEM scratch (Bb, Hp) f32 carrying h_{t-1} across sequential steps
# ---------------------------------------------------------------------------
def make_gru_kernel(tb, hidden_p, unroll):
    Hp = hidden_p

    def gru_kernel(xw_ref, whh_ref, o_ref, h_ref):
        # Reset the carried hidden state at the start of each batch shard.  This
        # keeps the kernel correct both for sequential single-core iteration and
        # for a per-core split of the leading axis (each core has its own scratch).
        @pl.when(pl.program_id(1) == 0)
        def _():
            h_ref[...] = jnp.zeros_like(h_ref)

        whh = whh_ref[...]                              # (Hp, 3Hp) bf16, resident

        def step(tt, h):
            gx = xw_ref[tt].astype(jnp.float32)         # dense (Bb, 3Hp) tile
            gh = jnp.dot(h.astype(jnp.bfloat16), whh,
                         preferred_element_type=jnp.float32)
            r = jax.nn.sigmoid(gx[:, 0:Hp] + gh[:, 0:Hp])
            z = jax.nn.sigmoid(gx[:, Hp:2 * Hp] + gh[:, Hp:2 * Hp])
            n = jnp.tanh(gx[:, 2 * Hp:3 * Hp] + r * gh[:, 2 * Hp:3 * Hp])
            h = (1.0 - z) * n + z * h
            o_ref[tt] = h.astype(o_ref.dtype)           # dense (Bb, Hp) store
            return h

        h_ref[...] = lax.fori_loop(0, tb, step, h_ref[...], unroll=unroll)

    return gru_kernel


# ---------------------------------------------------------------------------
# Forward implementation.
# ---------------------------------------------------------------------------
def _bn_gru_impl(x_nchw, w_ih, w_hh, eps, single_buffer_weights):
    B, C, T, F = x_nchw.shape
    assert C == 1
    H3 = w_ih.shape[1]
    H = H3 // 3
    assert w_hh.shape == (H, H3)

    Hp = _round_up(H, 128)             # lane-align the gate boundaries
    H3p = 3 * Hp

    vmem_cap = _vmem_capacity_bytes()
    vmem_limit = min(int(vmem_cap * 0.85), 100 * 1024 * 1024)
    plan_budget = int(vmem_cap * 0.55)  # explicit accounting; headroom for compiler

    x = x_nchw.reshape(B, T, F).astype(jnp.float32)

    # ---- BatchNorm2d(1) training-mode statistics, single pass over x --------
    mean = jnp.mean(x)
    var = jnp.maximum(jnp.mean(jnp.square(x)) - mean * mean, 0.0)  # biased var
    inv = lax.rsqrt(var + eps)

    # ---- pad each gate block to width Hp and fold BN into the projection ----
    def pad_gates(w):
        if Hp == H:
            return w
        r = w.shape[0]
        return jnp.pad(w.reshape(r, 3, H),
                       ((0, 0), (0, 0), (0, Hp - H))).reshape(r, 3 * Hp)

    w_ih_p = pad_gates(w_ih.astype(jnp.float32))                    # (F, 3Hp)
    w_hh_p = pad_gates(w_hh.astype(jnp.float32))                    # (H, 3Hp)
    if Hp != H:
        w_hh_p = jnp.pad(w_hh_p, ((0, Hp - H), (0, 0)))             # (Hp, 3Hp)

    # ((x - mean) * inv) @ W == x @ (inv * W) + (-mean * inv) * colsum(W)
    w_eff = (inv * w_ih_p).astype(jnp.bfloat16)                     # (F, 3Hp) bf16
    b_eff = (-mean * inv) * jnp.sum(w_ih_p, axis=0, keepdims=True)  # (1, 3Hp) f32
    whh_b16 = w_hh_p.astype(jnp.bfloat16)                           # (Hp, 3Hp)

    def const_spec(shape, index_map):
        if single_buffer_weights:
            return pl.BlockSpec(shape, index_map,
                                pipeline_mode=pl.Buffered(buffer_count=1))
        return pl.BlockSpec(shape, index_map)

    w_bufs = 1 if single_buffer_weights else 2

    # ---- input projection for ALL timesteps (time-major rows) ---------------
    # Transpose x to (T, B, F) (F-wide, cheaper than transposing the 3H-wide xw)
    # so the projection output reshapes for free into the time-major layout
    # the recurrence wants.
    M = T * B
    x2 = jnp.transpose(x, (1, 0, 2)).reshape(M, F).astype(jnp.bfloat16)

    per_row = 2 * (F * 2 + H3p * 2)                 # double-buffered in+out rows
    fixed = w_bufs * F * H3p * 2 + 2 * H3p * 4
    tm_cap = max(8, (plan_budget - fixed) // max(per_row, 1))
    tm = _pick_divisor_tile(M, min(tm_cap, 1024), 8)

    xw = pl.pallas_call(
        proj_kernel,
        out_shape=jax.ShapeDtypeStruct((M, H3p), jnp.bfloat16),
        grid_spec=pltpu.PrefetchScalarGridSpec(
            num_scalar_prefetch=0,
            grid=(M // tm,),
            in_specs=[
                pl.BlockSpec((tm, F), lambda i: (i, 0)),
                const_spec((F, H3p), lambda i: (0, 0)),
                const_spec((1, H3p), lambda i: (0, 0)),
            ],
            out_specs=pl.BlockSpec((tm, H3p), lambda i: (i, 0)),
        ),
        compiler_params=pltpu.CompilerParams(
            dimension_semantics=("parallel",),
            vmem_limit_bytes=vmem_limit),
    )(x2, w_eff, b_eff).reshape(T, B, H3p)          # free reshape (time-major)

    # ---- GRU recurrence ------------------------------------------------------
    n_tc = _num_tensorcores()
    n_bshards = 1
    if n_tc > 1 and B % n_tc == 0 and (B // n_tc) % 8 == 0:
        n_bshards = n_tc                            # only shard when it keeps dense tiles
    Bb = B // n_bshards

    per_t = 2 * Bb * (H3p * 2 + Hp * 4)             # double-buffered xw + out rows
    fixed = w_bufs * Hp * H3p * 2 + Bb * Hp * 4
    tb_cap = max(1, (plan_budget - fixed) // max(per_t, 1))
    Tb = _pick_divisor_tile(T, min(tb_cap, 128), 1)
    unroll = max(1, min(Tb, 8))

    out_tbh = pl.pallas_call(
        make_gru_kernel(Tb, Hp, unroll),
        out_shape=jax.ShapeDtypeStruct((T, B, Hp), jnp.float32),
        grid_spec=pltpu.PrefetchScalarGridSpec(
            num_scalar_prefetch=0,
            grid=(n_bshards, T // Tb),
            in_specs=[
                pl.BlockSpec((Tb, Bb, H3p), lambda b, t: (t, b, 0)),
                const_spec((Hp, H3p), lambda b, t: (0, 0)),
            ],
            out_specs=pl.BlockSpec((Tb, Bb, Hp), lambda b, t: (t, b, 0)),
            scratch_shapes=[pltpu.VMEM((Bb, Hp), jnp.float32)],
        ),
        compiler_params=pltpu.CompilerParams(
            # Batch shards are independent (the h carry is reset at t == 0);
            # the time axis is the sequential recurrence.
            dimension_semantics=("parallel", "arbitrary"),
            vmem_limit_bytes=vmem_limit),
    )(xw, whh_b16)

    out = jnp.transpose(out_tbh[:, :, :H], (1, 0, 2))   # (B, T, H), drop gate padding
    return out[:, None, :, :]                           # unsqueeze(1) -> (B, 1, T, H)


def bn_gru_forward(x_nchw, w_ih, w_hh, eps=1e-5):
    """x_nchw: (B, 1, T, F); w_ih: (F, 3H); w_hh: (H, 3H).  Returns (B, 1, T, H)."""
    try:
        return _bn_gru_impl(x_nchw, w_ih, w_hh, eps, single_buffer_weights=True)
    except Exception:
        # pipeline_mode=pl.Buffered(1) (single-buffered constant weight blocks)
        # unsupported on this toolchain -> retry with default double buffering.
        return _bn_gru_impl(x_nchw, w_ih, w_hh, eps, single_buffer_weights=False)


# ---------------------------------------------------------------------------
# Deterministic parameter init mimicking BN_GRU.init_weights():
#   weight_ih: xavier_uniform, weight_hh: orthogonal, biases: 0 (omitted).
# Returned in fused/transposed layout: (F, 3H) and (H, 3H), gate order [r|z|n].
# ---------------------------------------------------------------------------
def init_params(key, input_dim, hidden_dim):
    k_ih, k_hh = jax.random.split(key)
    three_h = 3 * hidden_dim

    a = math.sqrt(6.0 / (input_dim + three_h))
    w_ih_torch = jax.random.uniform(
        k_ih, (three_h, input_dim), minval=-a, maxval=a, dtype=jnp.float32)

    g = jax.random.normal(k_hh, (three_h, hidden_dim), dtype=jnp.float32)
    q, _ = jnp.linalg.qr(g)
    w_hh_torch = q[:, :hidden_dim]

    return jnp.transpose(w_ih_torch), jnp.transpose(w_hh_torch)   # (F,3H), (H,3H)


# ---------------------------------------------------------------------------
# Pure-JAX reference (BatchNorm2d(1) train-mode + GRU scan) for validation.
# ---------------------------------------------------------------------------
def ref_forward(x_nchw, w_ih, w_hh, eps=1e-5):
    B, C, T, F = x_nchw.shape
    x = x_nchw.reshape(B, T, F).astype(jnp.float32)
    mean = jnp.mean(x)
    var = jnp.mean(jnp.square(x - mean))
    xb = (x - mean) * lax.rsqrt(var + eps)
    H = w_hh.shape[0]
    hp = lax.Precision.HIGHEST

    def step(h, x_t):
        gx = jnp.dot(x_t, w_ih, precision=hp)
        gh = jnp.dot(h, w_hh, precision=hp)
        r = jax.nn.sigmoid(gx[:, :H] + gh[:, :H])
        z = jax.nn.sigmoid(gx[:, H:2 * H] + gh[:, H:2 * H])
        n = jnp.tanh(gx[:, 2 * H:] + r * gh[:, 2 * H:])
        h_new = (1.0 - z) * n + z * h
        return h_new, h_new

    h0 = jnp.zeros((B, H), jnp.float32)
    _, ys = lax.scan(step, h0, jnp.swapaxes(xb, 0, 1))
    return jnp.swapaxes(ys, 0, 1)[:, None, :, :]


if __name__ == "__main__":
    B, T, F, H = 2, 8, 16, 32

    key = jax.random.PRNGKey(0)
    k_x, k_p = jax.random.split(key)

    x = jax.random.normal(k_x, (B, 1, T, F), dtype=jnp.float32)  # NCHW, C=1
    w_ih, w_hh = init_params(k_p, F, H)

    out = bn_gru_forward(x, w_ih, w_hh)
    out = jax.block_until_ready(out)

    assert out.shape == (B, 1, T, H), out.shape
    assert bool(jnp.all(jnp.isfinite(out)))

    ref = jax.block_until_ready(ref_forward(x, w_ih, w_hh))
    err = float(jnp.max(jnp.abs(out - ref)))
    # bf16 MXU operands + bf16 xw intermediate: tolerance relaxed vs the all-f32 kernel.
    assert err < 5e-2, f"max abs err vs reference: {err}"

    print("KERNEL_OK")
</pallas_src>

<mosaic_0001>
module attributes {stable_mosaic.version = 11 : i64} {
  func.func @proj_kernel(%arg0: i32, %arg1: memref<16x16xbf16, #tpu.memory_space<vmem>>, %arg2: memref<16x384xbf16, #tpu.memory_space<vmem>>, %arg3: memref<1x384xf32, #tpu.memory_space<vmem>>, %arg4: memref<16x384xbf16, #tpu.memory_space<vmem>>) attributes {dimension_semantics = [#tpu.dimension_semantics<parallel>], iteration_bounds = array<i64: 1>, scalar_prefetch = 0 : i64, scratch_operands = 0 : i64, tpu.core_type = #tpu.core_type<tc>, window_params = [{transform_indices = @transform_0, window_bounds = array<i64: 16, 16>}, {pipeline_mode = #tpu.pipeline_mode<synchronous>, transform_indices = @transform_1, window_bounds = array<i64: 16, 384>}, {pipeline_mode = #tpu.pipeline_mode<synchronous>, transform_indices = @transform_2, window_bounds = array<i64: 1, 384>}, {transform_indices = @transform_3, window_bounds = array<i64: 16, 384>}]} {
    %c0 = arith.constant 0 : index
    %c0_0 = arith.constant 0 : index
    %0 = vector.load %arg1[%c0, %c0_0] : memref<16x16xbf16, #tpu.memory_space<vmem>>, vector<16x16xbf16>
    %c0_1 = arith.constant 0 : index
    %c0_2 = arith.constant 0 : index
    %1 = vector.load %arg2[%c0_1, %c0_2] : memref<16x384xbf16, #tpu.memory_space<vmem>>, vector<16x384xbf16>
    %cst = arith.constant dense<0.000000e+00> : vector<16x384xf32>
    %2 = tpu.matmul %0, %1, %cst {dimension_numbers = #tpu.dot_dimension_numbers<[1], [0], [0], [1], [0, 0, 1, 1], [], []>} : vector<16x16xbf16>, vector<16x384xbf16>, vector<16x384xf32> -> vector<16x384xf32>
    %c0_3 = arith.constant 0 : index
    %c0_4 = arith.constant 0 : index
    %3 = vector.load %arg3[%c0_3, %c0_4] : memref<1x384xf32, #tpu.memory_space<vmem>>, vector<1x384xf32>
    %4 = vector.broadcast %3 : vector<1x384xf32> to vector<16x384xf32>
    %5 = arith.addf %2, %4 : vector<16x384xf32>
    %6 = arith.truncf %5 : vector<16x384xf32> to vector<16x384xbf16>
    %c0_5 = arith.constant 0 : index
    %c0_6 = arith.constant 0 : index
    %7 = vector.load %arg4[%c0_5, %c0_6] : memref<16x384xbf16, #tpu.memory_space<vmem>>, vector<16x384xbf16>
    tpu.vector_store %arg4[%c0_5, %c0_6], %6 {strides = array<i32>} : memref<16x384xbf16, #tpu.memory_space<vmem>>, vector<16x384xbf16>,
    return
  }
  func.func @transform_0(%arg0: i32) -> (i32, i32) {
    %c0_i32 = arith.constant 0 : i32
    %c0_i32_0 = arith.constant 0 : i32
    return %arg0, %c0_i32 : i32, i32
  }
  func.func @transform_1(%arg0: i32) -> (i32, i32) {
    %c0_i32 = arith.constant 0 : i32
    %c0_i32_0 = arith.constant 0 : i32
    %c0_i32_1 = arith.constant 0 : i32
    return %c0_i32, %c0_i32_0 : i32, i32
  }
  func.func @transform_2(%arg0: i32) -> (i32, i32) {
    %c0_i32 = arith.constant 0 : i32
    %c0_i32_0 = arith.constant 0 : i32
    %c0_i32_1 = arith.constant 0 : i32
    return %c0_i32, %c0_i32_0 : i32, i32
  }
  func.func @transform_3(%arg0: i32) -> (i32, i32) {
    %c0_i32 = arith.constant 0 : i32
    %c0_i32_0 = arith.constant 0 : i32
    return %arg0, %c0_i32 : i32, i32
  }
}

module attributes {stable_mosaic.version = 11 : i64} {
  func.func @proj_kernel(%arg0: i32, %arg1: memref<16x16xbf16, #tpu.memory_space<vmem>>, %arg2: memref<16x384xbf16, #tpu.memory_space<vmem>>, %arg3: memref<1x384xf32, #tpu.memory_space<vmem>>, %arg4: memref<16x384xbf16, #tpu.memory_space<vmem>>) attributes {dimension_semantics = [#tpu.dimension_semantics<parallel>], iteration_bounds = array<i64: 1>, scalar_prefetch = 0 : i64, scratch_operands = 0 : i64, tpu.core_type = #tpu.core_type<tc>, window_params = [{transform_indices = @transform_0, window_bounds = array<i64: 16, 16>}, {pipeline_mode = #tpu.pipeline_mode<synchronous>, transform_indices = @transform_1, window_bounds = array<i64: 16, 384>}, {pipeline_mode = #tpu.pipeline_mode<synchronous>, transform_indices = @transform_2, window_bounds = array<i64: 1, 384>}, {transform_indices = @transform_3, window_bounds = array<i64: 16, 384>}]} {
    %c0 = arith.constant 0 : index
    %c0_0 = arith.constant 0 : index
    %0 = vector.load %arg1[%c0, %c0_0] : memref<16x16xbf16, #tpu.memory_space<vmem>>, vector<16x16xbf16>
    %c0_1 = arith.constant 0 : index
    %c0_2 = arith.constant 0 : index
    %1 = vector.load %arg2[%c0_1, %c0_2] : memref<16x384xbf16, #tpu.memory_space<vmem>>, vector<16x384xbf16>
    %cst = arith.constant dense<0.000000e+00> : vector<16x384xf32>
    %2 = tpu.matmul %0, %1, %cst {dimension_numbers = #tpu.dot_dimension_numbers<[1], [0], [0], [1], [0, 0, 1, 1], [], []>} : vector<16x16xbf16>, vector<16x384xbf16>, vector<16x384xf32> -> vector<16x384xf32>
    %c0_3 = arith.constant 0 : index
    %c0_4 = arith.constant 0 : index
    %3 = vector.load %arg3[%c0_3, %c0_4] : memref<1x384xf32, #tpu.memory_space<vmem>>, vector<1x384xf32>
    %4 = vector.broadcast %3 : vector<1x384xf32> to vector<16x384xf32>
    %5 = arith.addf %2, %4 : vector<16x384xf32>
    %6 = arith.truncf %5 : vector<16x384xf32> to vector<16x384xbf16>
    %c0_5 = arith.constant 0 : index
    %c0_6 = arith.constant 0 : index
    %7 = vector.load %arg4[%c0_5, %c0_6] : memref<16x384xbf16, #tpu.memory_space<vmem>>, vector<16x384xbf16>
    tpu.vector_store %arg4[%c0_5, %c0_6], %6 {strides = array<i32>} : memref<16x384xbf16, #tpu.memory_space<vmem>>, vector<16x384xbf16>,
    return
  }
  func.func @transform_0(%arg0: i32) -> (i32, i32) {
    %c0_i32 = arith.constant 0 : i32
    %c0_i32_0 = arith.constant 0 : i32
    return %arg0, %c0_i32 : i32, i32
  }
  func.func @transform_1(%arg0: i32) -> (i32, i32) {
    %c0_i32 = arith.constant 0 : i32
    %c0_i32_0 = arith.constant 0 : i32
    %c0_i32_1 = arith.constant 0 : i32
    return %c0_i32, %c0_i32_0 : i32, i32
  }
  func.func @transform_2(%arg0: i32) -> (i32, i32) {
    %c0_i32 = arith.constant 0 : i32
    %c0_i32_0 = arith.constant 0 : i32
    %c0_i32_1 = arith.constant 0 : i32
    return %c0_i32, %c0_i32_0 : i32, i32
  }
  func.func @transform_3(%arg0: i32) -> (i32, i32) {
    %c0_i32 = arith.constant 0 : i32
    %c0_i32_0 = arith.constant 0 : i32
    return %arg0, %c0_i32 : i32, i32
  }
}

</mosaic_0001>

<llo_original>
// kernel: tpu_custom_call.1
$region0: #{tpu_custom_call.1}
  #allocation0 [shape = 'u32[]', space=smem, size = 0x4, offset = 0x4, fixed_abs, tag = 'smem constant byte address 0x4 - core index']
  #allocation1 [shape = 'u32[144,128]{1,0:T(1,128)}', space=vmem, size = 0x12000, scoped, tag = 'internal scratch']
  %s0 = inlined_call_operand.hbm [shape: bf16[16,16], index: 0, kind: input, shape index: {}]
  %s1 = inlined_call_operand.hbm [shape: bf16[16,384], index: 1, kind: input, shape index: {}]
  %s2 = inlined_call_operand.vmem [shape: f32[1,384], index: 2, kind: input, shape index: {}]
  %s3 = inlined_call_operand.hbm [shape: bf16[16,384], index: 3, kind: output, shape index: {}]
  %s4 = sld [smem:[#allocation0]]
  $region30: #{tpu_custom_call.1} parent=0
    _
  %s6 = ssub.s32 1, %s4
  %s7 = scalar_select 0, %s6, %s4
  $region1: #{tpu_custom_call.1} parent=0
    #allocation2 [shape = 'u8[4096]{0}', space=vmem, size = 0x1000, scoped, tag = 'input window, operand 0, single buffered']
    #allocation3 [shape = 's32[1]{0}', space=sflag, size = 0x4, scoped, tag = 'scoped memory for tpu_custom_call.1']
    #allocation4 [shape = 's32[1]{0}', space=sflag, size = 0x4, scoped, tag = 'scoped memory for tpu_custom_call.1']
    #allocation5 [shape = 'u8[12288]{0}', space=vmem, size = 0x3000, scoped, tag = 'input window, operand 1, single buffered']
    #allocation6 [shape = 's32[1]{0}', space=sflag, size = 0x4, scoped, tag = 'scoped memory for tpu_custom_call.1']
    #allocation7 [shape = 'u8[12288]{0}', space=vmem, size = 0x3000, scoped, tag = 'output window, operand 0, single buffered']
    %8 = vsyncpa [#allocation3], 0
    %9 = vsyncpa [#allocation6], 0
    %10 = vsyncpa [#allocation4], 0
    // Predicated region
    $region2: #{tpu_custom_call.1} parent=1 // pred_check
      _
    $region3: #{tpu_custom_call.1} parent=1 // pred_check_branch
      %12 = sbr.rel (0) target = $region5
    $region4: #{tpu_custom_call.1} parent=1 // pred_region
      %s14 = ssub.s32 128, 128
      %15 = vsyncadd [#allocation3], %s14
      %s16 = sshll.u32 [#allocation2], 4
      %s17 = int_to_ptr.vmem [resolvable:$true] %s16
      %22 = dma.hbm_to_vmem [thread:$0]  %s0, 128, %s17, [#allocation3], 64, 64, 4
    $region5: #{tpu_custom_call.1} parent=1 // pred_fallthru
      _
    // Predicated region
    $region6: #{tpu_custom_call.1} parent=1 // pred_check
      _
    $region7: #{tpu_custom_call.1} parent=1 // pred_check_branch
      %24 = sbr.rel (0) target = $region9
    $region8: #{tpu_custom_call.1} parent=1 // pred_region
      %s26 = ssub.s32 384, 384
      %27 = vsyncadd [#allocation6], %s26
      %s28 = sshll.u32 [#allocation5], 4
      %s29 = int_to_ptr.vmem [resolvable:$true] %s28
      %34 = dma.hbm_to_vmem [thread:$0]  %s1, 384, %s29, [#allocation6], 192, 192, 12
    $region9: #{tpu_custom_call.1} parent=1 // pred_fallthru
      _
    // Predicated region
    $region10: #{tpu_custom_call.1} parent=1 // pred_check
      _
    $region11: #{tpu_custom_call.1} parent=1 // pred_check_branch
      %36 = sbr.rel (0) target = $region13
    $region12: #{tpu_custom_call.1} parent=1 // pred_region
      _
    $region13: #{tpu_custom_call.1} parent=1 // pred_fallthru
      _
    // Predicated region
    $region14: #{tpu_custom_call.1} parent=1 // pred_check
      _
    $region15: #{tpu_custom_call.1} parent=1 // pred_check_branch
      %38 = sbr.rel (0) target = $region17
    $region16: #{tpu_custom_call.1} parent=1 // pred_region
      %39 = dma.done [#allocation3], 128
    $region17: #{tpu_custom_call.1} parent=1 // pred_fallthru
      _
    // Predicated region
    $region18: #{tpu_custom_call.1} parent=1 // pred_check
      _
    $region19: #{tpu_custom_call.1} parent=1 // pred_check_branch
      %41 = sbr.rel (0) target = $region21
    $region20: #{tpu_custom_call.1} parent=1 // pred_region
      %42 = dma.done [#allocation6], 384
    $region21: #{tpu_custom_call.1} parent=1 // pred_fallthru
      _
    %v44 = vld [vmem:[#allocation2] sm:$0xf]
    %v45 = vld [vmem:[#allocation2 + $0x4] sm:$0xf]
    %v46 = vld [vmem:[#allocation5] sm:$0xff]
    %v47 = vld [vmem:[#allocation5 + $0x8] sm:$0xf]
    %v48 = vld [vmem:[#allocation5 + $0xc] sm:$0xff]
    %v49 = vld [vmem:[#allocation5 + $0x14] sm:$0xf]
    %v50 = vld [vmem:[%s2] sm:$0x7]
    %v52 = vlaneseq
    %v53 = vshrl.u32 %v52, 7
    %v54 = vsub.s32 0, %v53
    %v55 = vrot.slane %v50, %v54
    %v56 = vlaneseq
    %v57 = vshrl.u32 %v56, 7
    %v58 = vsub.s32 1, %v57
    %v59 = vrot.slane %v50, %v58
    %v60 = vlaneseq
    %v61 = vshrl.u32 %v60, 7
    %v62 = vsub.s32 2, %v61
    %v63 = vrot.slane %v50, %v62
    %v69 = vunpack.c.l.b16 %v44
    %v70 = vunpack.c.l.b16 %v45
    %v71 = vpack.c.b16 %v70, %v69
    %v76 = vunpack.c.l.b16 %v46
    %v77 = vunpack.c.h.b16 %v46
    %v78 = vunpack.c.l.b16 %v47
    %v79 = vunpack.c.l.b16 %v48
    %v80 = vunpack.c.h.b16 %v48
    %v81 = vunpack.c.l.b16 %v49
    %v82 = vpack.c.b16 %v79, %v76
    %v83 = vpack.c.b16 %v80, %v77
    %v84 = vpack.c.b16 %v81, %v78
    %vm88 = vcmask 130048
    %v90 = vsel %vm88, %v71, 0
    %92 = vmatprep.subr.bf16.mxu0 0
    %93 = vmatpush1.bf16.msra.mxu0 0
    %94 = vmatprep.subr.bf16.mxu0 0
    %95 = vmatpush1.bf16.msra.mxu0 0
    %96 = vmatprep.subr.bf16.mxu0 0
    %97 = vmatpush1.bf16.msra.mxu0 0
    %98 = vmatprep.subr.bf16.mxu0 0
    %99 = vmatpush1.bf16.msra.mxu0 0
    %100 = vmatprep.subr.bf16.mxu0 0
    %101 = vmatpush1.bf16.msra.mxu0 0
    %102 = vmatprep.subr.bf16.mxu0 0
    %103 = vmatpush1.bf16.msra.mxu0 0
    %104 = vmatprep.subr.bf16.mxu0 0
    %105 = vmatpush1.bf16.msra.mxu0 0
    %106 = vmatprep.subr.bf16.mxu0 %v83
    %107 = vmatpush1.bf16.msra.mxu0 %v82
    %108 = vmatprep.subr.bf16.mxu0 0
    %109 = vmatpush2.bf16.msra.mxu0 0
    %110 = vmatprep.subr.bf16.mxu0 0
    %111 = vmatpush2.bf16.msra.mxu0 0
    %112 = vmatprep.subr.bf16.mxu0 0
    %113 = vmatpush2.bf16.msra.mxu0 0
    %114 = vmatprep.subr.bf16.mxu0 0
    %115 = vmatpush2.bf16.msra.mxu0 0
    %116 = vmatprep.subr.bf16.mxu0 0
    %117 = vmatpush2.bf16.msra.mxu0 0
    %118 = vmatprep.subr.bf16.mxu0 0
    %119 = vmatpush2.bf16.msra.mxu0 0
    %120 = vmatprep.subr.bf16.mxu0 0
    %121 = vmatpush2.bf16.msra.mxu0 0
    %122 = vmatprep.subr.bf16.mxu0 0
    %123 = vmatpush2.bf16.msra.mxu0 0
    %124 = vmatprep.mubr.bf16.mxu0 0
    %125 = vmatmul.mubr.bf16.gmra.mxu0 %v90
    %v126 = vpop.f32.mrf.mxu0
    %v127 = vadd.f32 %v55, %v126
    %v128 = vpop.f32.mrf.mxu0
    %v129 = vadd.f32 %v59, %v128
    %v130 = vpop.f32.mrf.mxu0
    %v131 = vadd.f32 %v55, %v130
    %v132 = vpop.f32.mrf.mxu0
    %v133 = vadd.f32 %v59, %v132
    %134 = vdwg.mxu0
    %135 = vmatprep.subr.bf16.mxu0 0
    %136 = vmatpush1.bf16.msra.mxu0 0
    %137 = vmatprep.subr.bf16.mxu0 0
    %138 = vmatpush1.bf16.msra.mxu0 0
    %139 = vmatprep.subr.bf16.mxu0 0
    %140 = vmatpush1.bf16.msra.mxu0 0
    %141 = vmatprep.subr.bf16.mxu0 0
    %142 = vmatpush1.bf16.msra.mxu0 0
    %143 = vmatprep.subr.bf16.mxu0 0
    %144 = vmatpush1.bf16.msra.mxu0 0
    %145 = vmatprep.subr.bf16.mxu0 0
    %146 = vmatpush1.bf16.msra.mxu0 0
    %147 = vmatprep.subr.bf16.mxu0 0
    %148 = vmatpush1.bf16.msra.mxu0 0
    %149 = vmatprep.subr.bf16.mxu0 0
    %150 = vmatpush1.bf16.msra.mxu0 %v84
    %151 = vmatprep.subr.bf16.mxu0 0
    %152 = vmatpush2.bf16.msra.mxu0 0
    %153 = vmatprep.subr.bf16.mxu0 0
    %154 = vmatpush2.bf16.msra.mxu0 0
    %155 = vmatprep.subr.bf16.mxu0 0
    %156 = vmatpush2.bf16.msra.mxu0 0
    %157 = vmatprep.subr.bf16.mxu0 0
    %158 = vmatpush2.bf16.msra.mxu0 0
    %159 = vmatprep.subr.bf16.mxu0 0
    %160 = vmatpush2.bf16.msra.mxu0 0
    %161 = vmatprep.subr.bf16.mxu0 0
    %162 = vmatpush2.bf16.msra.mxu0 0
    %163 = vmatprep.subr.bf16.mxu0 0
    %164 = vmatpush2.bf16.msra.mxu0 0
    %165 = vmatprep.subr.bf16.mxu0 0
    %166 = vmatpush2.bf16.msra.mxu0 0
    %167 = vmatprep.mubr.bf16.mxu0 0
    %168 = vmatmul.mubr.bf16.gmra.mxu0 %v90
    %v169 = vpop.f32.mrf.mxu0
    %v170 = vadd.f32 %v63, %v169
    %v171 = vpop.f32.mrf.mxu0
    %v172 = vpop.f32.mrf.mxu0
    %v173 = vadd.f32 %v63, %v172
    %v174 = vpop.f32.mrf.mxu0
    %175 = vdwg.mxu0
    %v176 = vpack.c.bf16 %v131, %v127
    %v177 = vpack.c.bf16 %v133, %v129
    %v178 = vpack.c.bf16 %v173, %v170
    %v182 = vunpack.c.l.b16 %v176
    %v183 = vunpack.c.l.b16 %v177
    %v184 = vunpack.c.l.b16 %v178
    %v185 = vunpack.c.h.b16 %v176
    %v186 = vunpack.c.h.b16 %v177
    %v187 = vunpack.c.h.b16 %v178
    %v188 = vpack.c.b16 %v183, %v182
    %v189 = vpack.c.b16 %v184, %v184
    %v190 = vpack.c.b16 %v186, %v185
    %v191 = vpack.c.b16 %v187, %v187
    %196 = vst [vmem:[#allocation7] sm:$0xff] %v188
    %197 = vst [vmem:[#allocation7 + $0x8] sm:$0xf] %v189
    %198 = vst [vmem:[#allocation7 + $0xc] sm:$0xff] %v190
    %199 = vst [vmem:[#allocation7 + $0x14] sm:$0xf] %v191
    // Predicated region
    $region22: #{tpu_custom_call.1} parent=1 // pred_check
      _
    $region23: #{tpu_custom_call.1} parent=1 // pred_check_branch
      %201 = sbr.rel (0) target = $region25
    $region24: #{tpu_custom_call.1} parent=1 // pred_region
      %s203 = ssub.s32 384, 384
      %204 = vsyncadd [#allocation4], %s203
      %s205 = sshll.u32 [#allocation7], 4
      %s206 = int_to_ptr.vmem [resolvable:$true] %s205
      %211 = dma.vmem_to_hbm [thread:$0]  %s206, 384, %s3, [#allocation4], 192, 192, 12
    $region25: #{tpu_custom_call.1} parent=1 // pred_fallthru
      _
    // Predicated region
    $region26: #{tpu_custom_call.1} parent=1 // pred_check
      _
    $region27: #{tpu_custom_call.1} parent=1 // pred_check_branch
      %213 = sbr.rel (0) target = $region29
    $region28: #{tpu_custom_call.1} parent=1 // pred_region
      %214 = dma.done [#allocation4], 384
    $region29: #{tpu_custom_call.1} parent=1 // pred_fallthru
      _
    %215 = vsyncpa [#allocation3], 1
    %216 = vsyncpa [#allocation6], 1
    %217 = vsyncpa [#allocation4], 1

// kernel: tpu_custom_call.1
$region0: #{tpu_custom_call.1}
  #allocation0 [shape = 'u32[]', space=smem, size = 0x4, offset = 0x4, fixed_abs, tag = 'smem constant byte address 0x4 - core index']
  #allocation1 [shape = 'u32[144,128]{1,0:T(1,128)}', space=vmem, size = 0x12000, scoped, tag = 'internal scratch']
  %s0 = inlined_call_operand.hbm [shape: bf16[16,16], index: 0, kind: input, shape index: {}]
  %s1 = inlined_call_operand.hbm [shape: bf16[16,384], index: 1, kind: input, shape index: {}]
  %s2 = inlined_call_operand.vmem [shape: f32[1,384], index: 2, kind: input, shape index: {}]
  %s3 = inlined_call_operand.hbm [shape: bf16[16,384], index: 3, kind: output, shape index: {}]
  %s4 = sld [smem:[#allocation0]]
  $region30: #{tpu_custom_call.1} parent=0
    _
  %s6 = ssub.s32 1, %s4
  %s7 = scalar_select 0, %s6, %s4
  $region1: #{tpu_custom_call.1} parent=0
    #allocation2 [shape = 'u8[4096]{0}', space=vmem, size = 0x1000, scoped, tag = 'input window, operand 0, single buffered']
    #allocation3 [shape = 's32[1]{0}', space=sflag, size = 0x4, scoped, tag = 'scoped memory for tpu_custom_call.1']
    #allocation4 [shape = 's32[1]{0}', space=sflag, size = 0x4, scoped, tag = 'scoped memory for tpu_custom_call.1']
    #allocation5 [shape = 'u8[12288]{0}', space=vmem, size = 0x3000, scoped, tag = 'input window, operand 1, single buffered']
    #allocation6 [shape = 's32[1]{0}', space=sflag, size = 0x4, scoped, tag = 'scoped memory for tpu_custom_call.1']
    #allocation7 [shape = 'u8[12288]{0}', space=vmem, size = 0x3000, scoped, tag = 'output window, operand 0, single buffered']
    %8 = vsyncpa [#allocation3], 0
    %9 = vsyncpa [#allocation6], 0
    %10 = vsyncpa [#allocation4], 0
    // Predicated region
    $region2: #{tpu_custom_call.1} parent=1 // pred_check
      _
    $region3: #{tpu_custom_call.1} parent=1 // pred_check_branch
      %12 = sbr.rel (0) target = $region5
    $region4: #{tpu_custom_call.1} parent=1 // pred_region
      %s14 = ssub.s32 128, 128
      %15 = vsyncadd [#allocation3], %s14
      %s16 = sshll.u32 [#allocation2], 4
      %s17 = int_to_ptr.vmem [resolvable:$true] %s16
      %22 = dma.hbm_to_vmem [thread:$0]  %s0, 128, %s17, [#allocation3], 64, 64, 4
    $region5: #{tpu_custom_call.1} parent=1 // pred_fallthru
      _
    // Predicated region
    $region6: #{tpu_custom_call.1} parent=1 // pred_check
      _
    $region7: #{tpu_custom_call.1} parent=1 // pred_check_branch
      %24 = sbr.rel (0) target = $region9
    $region8: #{tpu_custom_call.1} parent=1 // pred_region
      %s26 = ssub.s32 384, 384
      %27 = vsyncadd [#allocation6], %s26
      %s28 = sshll.u32 [#allocation5], 4
      %s29 = int_to_ptr.vmem [resolvable:$true] %s28
      %34 = dma.hbm_to_vmem [thread:$0]  %s1, 384, %s29, [#allocation6], 192, 192, 12
    $region9: #{tpu_custom_call.1} parent=1 // pred_fallthru
      _
    // Predicated region
    $region10: #{tpu_custom_call.1} parent=1 // pred_check
      _
    $region11: #{tpu_custom_call.1} parent=1 // pred_check_branch
      %36 = sbr.rel (0) target = $region13
    $region12: #{tpu_custom_call.1} parent=1 // pred_region
      _
    $region13: #{tpu_custom_call.1} parent=1 // pred_fallthru
      _
    // Predicated region
    $region14: #{tpu_custom_call.1} parent=1 // pred_check
      _
    $region15: #{tpu_custom_call.1} parent=1 // pred_check_branch
      %38 = sbr.rel (0) target = $region17
    $region16: #{tpu_custom_call.1} parent=1 // pred_region
      %39 = dma.done [#allocation3], 128
    $region17: #{tpu_custom_call.1} parent=1 // pred_fallthru
      _
    // Predicated region
    $region18: #{tpu_custom_call.1} parent=1 // pred_check
      _
    $region19: #{tpu_custom_call.1} parent=1 // pred_check_branch
      %41 = sbr.rel (0) target = $region21
    $region20: #{tpu_custom_call.1} parent=1 // pred_region
      %42 = dma.done [#allocation6], 384
    $region21: #{tpu_custom_call.1} parent=1 // pred_fallthru
      _
    %v44 = vld [vmem:[#allocation2] sm:$0xf]
    %v45 = vld [vmem:[#allocation2 + $0x4] sm:$0xf]
    %v46 = vld [vmem:[#allocation5] sm:$0xff]
    %v47 = vld [vmem:[#allocation5 + $0x8] sm:$0xf]
    %v48 = vld [vmem:[#allocation5 + $0xc] sm:$0xff]
    %v49 = vld [vmem:[#allocation5 + $0x14] sm:$0xf]
    %v50 = vld [vmem:[%s2] sm:$0x7]
    %v52 = vlaneseq
    %v53 = vshrl.u32 %v52, 7
    %v54 = vsub.s32 0, %v53
    %v55 = vrot.slane %v50, %v54
    %v56 = vlaneseq
    %v57 = vshrl.u32 %v56, 7
    %v58 = vsub.s32 1, %v57
    %v59 = vrot.slane %v50, %v58
    %v60 = vlaneseq
    %v61 = vshrl.u32 %v60, 7
    %v62 = vsub.s32 2, %v61
    %v63 = vrot.slane %v50, %v62
    %v69 = vunpack.c.l.b16 %v44
    %v70 = vunpack.c.l.b16 %v45
    %v71 = vpack.c.b16 %v70, %v69
    %v76 = vunpack.c.l.b16 %v46
    %v77 = vunpack.c.h.b16 %v46
    %v78 = vunpack.c.l.b16 %v47
    %v79 = vunpack.c.l.b16 %v48
    %v80 = vunpack.c.h.b16 %v48
    %v81 = vunpack.c.l.b16 %v49
    %v82 = vpack.c.b16 %v79, %v76
    %v83 = vpack.c.b16 %v80, %v77
    %v84 = vpack.c.b16 %v81, %v78
    %vm88 = vcmask 130048
    %v90 = vsel %vm88, %v71, 0
    %92 = vmatprep.subr.bf16.mxu0 0
    %93 = vmatpush1.bf16.msra.mxu0 0
    %94 = vmatprep.subr.bf16.mxu0 0
    %95 = vmatpush1.bf16.msra.mxu0 0
    %96 = vmatprep.subr.bf16.mxu0 0
    %97 = vmatpush1.bf16.msra.mxu0 0
    %98 = vmatprep.subr.bf16.mxu0 0
    %99 = vmatpush1.bf16.msra.mxu0 0
    %100 = vmatprep.subr.bf16.mxu0 0
    %101 = vmatpush1.bf16.msra.mxu0 0
    %102 = vmatprep.subr.bf16.mxu0 0
    %103 = vmatpush1.bf16.msra.mxu0 0
    %104 = vmatprep.subr.bf16.mxu0 0
    %105 = vmatpush1.bf16.msra.mxu0 0
    %106 = vmatprep.subr.bf16.mxu0 %v83
    %107 = vmatpush1.bf16.msra.mxu0 %v82
    %108 = vmatprep.subr.bf16.mxu0 0
    %109 = vmatpush2.bf16.msra.mxu0 0
    %110 = vmatprep.subr.bf16.mxu0 0
    %111 = vmatpush2.bf16.msra.mxu0 0
    %112 = vmatprep.subr.bf16.mxu0 0
    %113 = vmatpush2.bf16.msra.mxu0 0
    %114 = vmatprep.subr.bf16.mxu0 0
    %115 = vmatpush2.bf16.msra.mxu0 0
    %116 = vmatprep.subr.bf16.mxu0 0
    %117 = vmatpush2.bf16.msra.mxu0 0
    %118 = vmatprep.subr.bf16.mxu0 0
    %119 = vmatpush2.bf16.msra.mxu0 0
    %120 = vmatprep.subr.bf16.mxu0 0
    %121 = vmatpush2.bf16.msra.mxu0 0
    %122 = vmatprep.subr.bf16.mxu0 0
    %123 = vmatpush2.bf16.msra.mxu0 0
    %124 = vmatprep.mubr.bf16.mxu0 0
    %125 = vmatmul.mubr.bf16.gmra.mxu0 %v90
    %v126 = vpop.f32.mrf.mxu0
    %v127 = vadd.f32 %v55, %v126
    %v128 = vpop.f32.mrf.mxu0
    %v129 = vadd.f32 %v59, %v128
    %v130 = vpop.f32.mrf.mxu0
    %v131 = vadd.f32 %v55, %v130
    %v132 = vpop.f32.mrf.mxu0
    %v133 = vadd.f32 %v59, %v132
    %134 = vdwg.mxu0
    %135 = vmatprep.subr.bf16.mxu0 0
    %136 = vmatpush1.bf16.msra.mxu0 0
    %137 = vmatprep.subr.bf16.mxu0 0
    %138 = vmatpush1.bf16.msra.mxu0 0
    %139 = vmatprep.subr.bf16.mxu0 0
    %140 = vmatpush1.bf16.msra.mxu0 0
    %141 = vmatprep.subr.bf16.mxu0 0
    %142 = vmatpush1.bf16.msra.mxu0 0
    %143 = vmatprep.subr.bf16.mxu0 0
    %144 = vmatpush1.bf16.msra.mxu0 0
    %145 = vmatprep.subr.bf16.mxu0 0
    %146 = vmatpush1.bf16.msra.mxu0 0
    %147 = vmatprep.subr.bf16.mxu0 0
    %148 = vmatpush1.bf16.msra.mxu0 0
    %149 = vmatprep.subr.bf16.mxu0 0
    %150 = vmatpush1.bf16.msra.mxu0 %v84
    %151 = vmatprep.subr.bf16.mxu0 0
    %152 = vmatpush2.bf16.msra.mxu0 0
    %153 = vmatprep.subr.bf16.mxu0 0
    %154 = vmatpush2.bf16.msra.mxu0 0
    %155 = vmatprep.subr.bf16.mxu0 0
    %156 = vmatpush2.bf16.msra.mxu0 0
    %157 = vmatprep.subr.bf16.mxu0 0
    %158 = vmatpush2.bf16.msra.mxu0 0
    %159 = vmatprep.subr.bf16.mxu0 0
    %160 = vmatpush2.bf16.msra.mxu0 0
    %161 = vmatprep.subr.bf16.mxu0 0
    %162 = vmatpush2.bf16.msra.mxu0 0
    %163 = vmatprep.subr.bf16.mxu0 0
    %164 = vmatpush2.bf16.msra.mxu0 0
    %165 = vmatprep.subr.bf16.mxu0 0
    %166 = vmatpush2.bf16.msra.mxu0 0
    %167 = vmatprep.mubr.bf16.mxu0 0
    %168 = vmatmul.mubr.bf16.gmra.mxu0 %v90
    %v169 = vpop.f32.mrf.mxu0
    %v170 = vadd.f32 %v63, %v169
    %v171 = vpop.f32.mrf.mxu0
    %v172 = vpop.f32.mrf.mxu0
    %v173 = vadd.f32 %v63, %v172
    %v174 = vpop.f32.mrf.mxu0
    %175 = vdwg.mxu0
    %v176 = vpack.c.bf16 %v131, %v127
    %v177 = vpack.c.bf16 %v133, %v129
    %v178 = vpack.c.bf16 %v173, %v170
    %v182 = vunpack.c.l.b16 %v176
    %v183 = vunpack.c.l.b16 %v177
    %v184 = vunpack.c.l.b16 %v178
    %v185 = vunpack.c.h.b16 %v176
    %v186 = vunpack.c.h.b16 %v177
    %v187 = vunpack.c.h.b16 %v178
    %v188 = vpack.c.b16 %v183, %v182
    %v189 = vpack.c.b16 %v184, %v184
    %v190 = vpack.c.b16 %v186, %v185
    %v191 = vpack.c.b16 %v187, %v187
    %196 = vst [vmem:[#allocation7] sm:$0xff] %v188
    %197 = vst [vmem:[#allocation7 + $0x8] sm:$0xf] %v189
    %198 = vst [vmem:[#allocation7 + $0xc] sm:$0xff] %v190
    %199 = vst [vmem:[#allocation7 + $0x14] sm:$0xf] %v191
    // Predicated region
    $region22: #{tpu_custom_call.1} parent=1 // pred_check
      _
    $region23: #{tpu_custom_call.1} parent=1 // pred_check_branch
      %201 = sbr.rel (0) target = $region25
    $region24: #{tpu_custom_call.1} parent=1 // pred_region
      %s203 = ssub.s32 384, 384
      %204 = vsyncadd [#allocation4], %s203
      %s205 = sshll.u32 [#allocation7], 4
      %s206 = int_to_ptr.vmem [resolvable:$true] %s205
      %211 = dma.vmem_to_hbm [thread:$0]  %s206, 384, %s3, [#allocation4], 192, 192, 12
    $region25: #{tpu_custom_call.1} parent=1 // pred_fallthru
      _
    // Predicated region
    $region26: #{tpu_custom_call.1} parent=1 // pred_check
      _
    $region27: #{tpu_custom_call.1} parent=1 // pred_check_branch
      %213 = sbr.rel (0) target = $region29
    $region28: #{tpu_custom_call.1} parent=1 // pred_region
      %214 = dma.done [#allocation4], 384
    $region29: #{tpu_custom_call.1} parent=1 // pred_fallthru
      _
    %215 = vsyncpa [#allocation3], 1
    %216 = vsyncpa [#allocation6], 1
    %217 = vsyncpa [#allocation4], 1

</llo_original>
